<compile_context>
chip_gen: v5e
topology: v5e:2x2
jax: 0.10.0
libtpu: 0.0.40
codegen_flags: <defaults>
</compile_context>

<pallas_src>
import functools

import numpy as np

import jax
import jax.numpy as jnp
from jax.experimental import pallas as pl
from jax.experimental.pallas import tpu as pltpu


def _yolo_kernel(pred_ref, gxy_ref, scale_ref, out_ref, *,
                 c5, approx_recip, compute_dtype):
    # pred_ref  : (Nb, R, THW) raw conv output block, R = A*(5+C)
    # gxy_ref   : (2, THW)     stride-scaled grid offsets for this lane tile
    #                          (row 0: grid_x*stride, row 1: grid_y*stride)
    # scale_ref : (R, 1)       per-row multiplicative scale
    #                          (x,y -> stride ; w,h -> anchor*stride ; else 1)
    # out_ref   : (Nb, R, THW) transformed detections, same lane-dense layout
    p = pred_ref[...].astype(compute_dtype)
    nb, r_rows, thw = p.shape

    # Channel index c = row % (5+C) as a tiny (1, R, 1) sublane vector.
    rmod = jax.lax.broadcasted_iota(jnp.int32, (r_rows, 1), 0) % c5
    rmod = rmod.reshape(1, r_rows, 1)
    is_exp = jnp.logical_or(rmod == 2, rmod == 3)           # w / h rows

    # Single EUP exp per element; sigmoid rows reuse it as 1 / (1 + exp(-p)).
    flip = jnp.where(is_exp, 1.0, -1.0).astype(compute_dtype)
    e = jnp.exp(p * flip)
    one_plus_e = 1.0 + e
    if approx_recip:
        sig = pl.reciprocal(one_plus_e, approx=True)        # EUP slot, has slack
    else:
        sig = 1.0 / one_plus_e
    base = jnp.where(is_exp, e, sig)

    # Grid offsets: only the x row gets gx*stride, only the y row gets gy*stride.
    gxy = gxy_ref[...].astype(compute_dtype)
    gx = gxy[0:1, :].reshape(1, 1, thw)
    gy = gxy[1:2, :].reshape(1, 1, thw)
    off = jnp.where(rmod == 0, gx, jnp.where(rmod == 1, gy, 0.0))

    # x,y: sigmoid*stride + grid*stride ; w,h: exp*anchor*stride ; conf/cls: sigmoid.
    scale = scale_ref[...].astype(compute_dtype).reshape(1, r_rows, 1)
    out_ref[...] = (base * scale + off).astype(out_ref.dtype)  # one dense store


def yolo_layer_forward(x, anchors, num_classes, img_dim, *,
                       output_layout="lane_dense",
                       out_dtype=None,
                       compute_dtype=jnp.float32,
                       approx_reciprocal=True,
                       block_byte_cap=2 * 1024 * 1024):
    """Equivalent of YOLOLayer.forward(x, targets=None, img_dim=img_dim).

    output_layout:
      "lane_dense" (default): returns (N, A, 5+C, H*W) -- same values as the
        torch module, kept in the kernel's lane-dense layout so no extra HBM
        relayout pass is paid.  Torch layout is recovered with
        out.transpose(0, 1, 3, 2).reshape(N, A*H*W, 5+C).
      "torch": returns (N, A*H*W, 5+C) exactly like the PyTorch module (costs
        one additional full-tensor transpose pass in XLA).
    compute_dtype: f32 by default; jnp.bfloat16 recommended only on v6e/v7x.
    out_dtype: defaults to x.dtype; pass jnp.float32 with bf16 inputs to avoid
      quantizing box coordinates.
    """
    N, C_in, H, W = x.shape
    A = len(anchors)
    C5 = num_classes + 5
    assert C_in == A * C5, (C_in, A, C5)
    HW = H * W
    R = A * C5
    out_dtype = jnp.dtype(x.dtype) if out_dtype is None else jnp.dtype(out_dtype)

    # Module convention: grid_size_w = x.size(3) = W, stride = img_dim[0] / W.
    stride = float(img_dim[0]) / float(W)

    # (N, A*(5+C), H, W) -> (N, R, HW): rows on sublanes, spatial on lanes.
    pred = x.reshape(N, R, HW)

    # Per-row scale vector, mirrors torch's scaled_anchors * stride chain.
    anc = np.asarray(anchors, dtype=np.float32)
    scaled = anc / np.float32(stride)                        # scaled_anchors
    row_scale = np.ones((A, C5), dtype=np.float32)
    row_scale[:, 0] = np.float32(stride)
    row_scale[:, 1] = np.float32(stride)
    row_scale[:, 2] = scaled[:, 0] * np.float32(stride)      # anchor_w * stride
    row_scale[:, 3] = scaled[:, 1] * np.float32(stride)      # anchor_h * stride
    row_scale = jnp.asarray(row_scale.reshape(R, 1))

    # Stride-scaled grid offsets, built once on the host (hoists the per-step
    # iota / %W / //W integer work out of the kernel).
    hw_idx = np.arange(HW, dtype=np.int64)
    gxy = np.stack([(hw_idx % W).astype(np.float32) * np.float32(stride),
                    (hw_idx // W).astype(np.float32) * np.float32(stride)],
                   axis=0)                                   # (2, HW)
    gxy = jnp.asarray(gxy)

    # --- Block sizing: batch-pack small heads, lane-tile large ones --------
    itemsize = max(jnp.dtype(x.dtype).itemsize, out_dtype.itemsize)
    per_sample_bytes = R * HW * itemsize
    if per_sample_bytes <= block_byte_cap:
        tile_hw = HW                                         # full lane extent
        nb = 1
        for d in range(min(N, block_byte_cap // per_sample_bytes), 0, -1):
            if N % d == 0:                                   # keep grid exact
                nb = d
                break
    else:
        nb = 1
        tile_hw = max(128, (block_byte_cap // (R * itemsize)) // 128 * 128)
        if tile_hw >= HW:
            tile_hw = HW
    grid = (N // nb, pl.cdiv(HW, tile_hw))

    kernel = functools.partial(_yolo_kernel, c5=C5,
                               approx_recip=approx_reciprocal,
                               compute_dtype=jnp.dtype(compute_dtype))

    out = pl.pallas_call(
        kernel,
        out_shape=jax.ShapeDtypeStruct((N, R, HW), out_dtype),
        grid=grid,
        in_specs=[
            pl.BlockSpec((nb, R, tile_hw), lambda b, t: (b, 0, t)),
            pl.BlockSpec((2, tile_hw), lambda b, t: (0, t)),
            pl.BlockSpec((R, 1), lambda b, t: (0, 0)),
        ],
        out_specs=pl.BlockSpec((nb, R, tile_hw), lambda b, t: (b, 0, t)),
        compiler_params=pltpu.CompilerParams(
            dimension_semantics=("parallel", "parallel")),
    )(pred, gxy, row_scale)

    if output_layout == "lane_dense":
        # Free reshape (contiguous split of the row axis), no extra HBM pass.
        return out.reshape(N, A, C5, HW), 0
    if output_layout == "torch":
        # Torch-compatible: (N,R,HW) -> (N,A,HW,5+C) -> (N, A*HW, 5+C).
        output = out.reshape(N, A, C5, HW).transpose(0, 1, 3, 2)
        return output.reshape(N, A * HW, C5), 0
    raise ValueError(f"unknown output_layout: {output_layout!r}")
    # TODO(synk): training branch (build_targets / focal_BCELoss losses) not
    # implemented -- it depends on external helpers and is not the hot path.


def _reference_forward(x, anchors, num_classes, img_dim):
    """Pure-JAX reference mirroring the PyTorch semantics exactly."""
    x = x.astype(jnp.float32)
    N, _, H, W = x.shape
    A = len(anchors)
    C5 = num_classes + 5
    stride = float(img_dim[0]) / float(W)

    pred = x.reshape(N, A, C5, H, W).transpose(0, 1, 3, 4, 2)  # (N,A,H,W,C5)
    sx = jax.nn.sigmoid(pred[..., 0])
    sy = jax.nn.sigmoid(pred[..., 1])
    w = pred[..., 2]
    h = pred[..., 3]
    conf = jax.nn.sigmoid(pred[..., 4])
    cls = jax.nn.sigmoid(pred[..., 5:])

    grid_x = jnp.tile(jnp.arange(W, dtype=jnp.float32), (H, 1)).reshape(1, 1, H, W)
    grid_y = jnp.tile(jnp.arange(H, dtype=jnp.float32), (W, 1)).T.reshape(1, 1, H, W)
    sa = jnp.asarray(anchors, dtype=jnp.float32) / stride
    anchor_w = sa[:, 0].reshape(1, A, 1, 1)
    anchor_h = sa[:, 1].reshape(1, A, 1, 1)

    boxes = jnp.stack(
        [sx + grid_x, sy + grid_y, jnp.exp(w) * anchor_w, jnp.exp(h) * anchor_h],
        axis=-1)
    output = jnp.concatenate(
        [boxes.reshape(N, -1, 4) * stride,
         conf.reshape(N, -1, 1),
         cls.reshape(N, -1, num_classes)], axis=-1)
    return output


def _dense_to_torch(dense):
    N, A, C5, HW = dense.shape
    return dense.transpose(0, 1, 3, 2).reshape(N, A * HW, C5)


if __name__ == "__main__":
    num_classes = 3
    anchors = [(10.0, 13.0), (16.0, 30.0), (33.0, 23.0)]
    img_dim = (128, 128)
    N, H, W = 2, 16, 16
    A = len(anchors)
    C5 = num_classes + 5
    C_in = A * C5

    key = jax.random.PRNGKey(0)
    x = jax.random.normal(key, (N, C_in, H, W), dtype=jnp.float32)
    ref = _reference_forward(x, anchors, num_classes, img_dim)

    # --- default path: lane-dense output, approx EUP reciprocal -------------
    dense, zero = yolo_layer_forward(x, anchors, num_classes, img_dim)
    dense = jax.block_until_ready(dense)
    assert zero == 0
    assert dense.shape == (N, A, C5, H * W), dense.shape
    assert jnp.allclose(_dense_to_torch(dense), ref, rtol=1e-2, atol=1e-2), \
        "default (approx) path mismatch vs reference"

    # --- torch-compatible layout + exact reciprocal: tight tolerance --------
    out_t, _ = yolo_layer_forward(x, anchors, num_classes, img_dim,
                                  output_layout="torch",
                                  approx_reciprocal=False)
    out_t = jax.block_until_ready(out_t)
    assert out_t.shape == (N, A * H * W, C5), out_t.shape
    assert jnp.allclose(out_t, ref, rtol=1e-5, atol=1e-5), \
        "torch-layout exact path mismatch vs reference"

    # --- non-square head (checks gx/gy layout and stride = img_dim[0]/W) ----
    H2, W2 = 8, 16
    x2 = jax.random.normal(jax.random.PRNGKey(1), (N, C_in, H2, W2),
                           dtype=jnp.float32)
    d2, _ = yolo_layer_forward(x2, anchors, num_classes, (128, 64),
                               approx_reciprocal=False)
    d2 = jax.block_until_ready(d2)
    ref2 = _reference_forward(x2, anchors, num_classes, (128, 64))
    assert jnp.allclose(_dense_to_torch(d2), ref2, rtol=1e-5, atol=1e-5), \
        "non-square mismatch"

    # --- forced lane tiling + partial tail tile (small block_byte_cap) ------
    H3, W3 = 20, 20                                   # HW=400: 256-lane tiles
    x3 = jax.random.normal(jax.random.PRNGKey(2), (N, C_in, H3, W3),
                           dtype=jnp.float32)
    d3, _ = yolo_layer_forward(x3, anchors, num_classes, (160, 160),
                               approx_reciprocal=False,
                               block_byte_cap=32 * 1024)
    d3 = jax.block_until_ready(d3)
    ref3 = _reference_forward(x3, anchors, num_classes, (160, 160))
    assert jnp.allclose(_dense_to_torch(d3), ref3, rtol=1e-5, atol=1e-5), \
        "lane-tiled path mismatch"

    # --- bf16 input, f32 output (halves input HBM traffic, keeps box precision)
    xb = x.astype(jnp.bfloat16)
    db, _ = yolo_layer_forward(xb, anchors, num_classes, img_dim,
                               out_dtype=jnp.float32)
    db = jax.block_until_ready(db)
    refb = _reference_forward(xb.astype(jnp.float32), anchors, num_classes, img_dim)
    assert db.dtype == jnp.float32
    assert jnp.allclose(_dense_to_torch(db), refb, rtol=1e-2, atol=1e-2), \
        "bf16-input path mismatch"

    # compute_dtype=jnp.bfloat16 is available for v6e/v7x callers (halves VALU
    # work); not exercised here to stay generation-agnostic on the test chip.

    print("KERNEL_OK")
</pallas_src>

<mosaic_0001>
module attributes {stable_mosaic.version = 11 : i64} {
  func.func @_yolo_kernel(%arg0: i32, %arg1: i32, %arg2: memref<2x24x256xf32, #tpu.memory_space<vmem>>, %arg3: memref<2x256xf32, #tpu.memory_space<vmem>>, %arg4: memref<24x1xf32, #tpu.memory_space<vmem>>, %arg5: memref<2x24x256xf32, #tpu.memory_space<vmem>>) attributes {dimension_semantics = [#tpu.dimension_semantics<parallel>, #tpu.dimension_semantics<parallel>], iteration_bounds = array<i64: 1, 1>, scalar_prefetch = 0 : i64, scratch_operands = 0 : i64, tpu.core_type = #tpu.core_type<tc>, window_params = [{transform_indices = @transform_0, window_bounds = array<i64: 2, 24, 256>}, {transform_indices = @transform_1, window_bounds = array<i64: 2, 256>}, {pipeline_mode = #tpu.pipeline_mode<synchronous>, transform_indices = @transform_2, window_bounds = array<i64: 24, 1>}, {transform_indices = @transform_3, window_bounds = array<i64: 2, 24, 256>}]} {
    %c0 = arith.constant 0 : index
    %c0_0 = arith.constant 0 : index
    %c0_1 = arith.constant 0 : index
    %0 = vector.load %arg2[%c0, %c0_0, %c0_1] : memref<2x24x256xf32, #tpu.memory_space<vmem>>, vector<2x24x256xf32>
    %1 = tpu.iota {dimensions = array<i32: 0>} : vector<24x1xi32>
    %c8_i32 = arith.constant 8 : i32
    %c0_i32 = arith.constant 0 : i32
    %2 = arith.cmpi eq, %c8_i32, %c0_i32 : i32
    %c1_i32 = arith.constant 1 : i32
    %3 = arith.select %2, %c1_i32, %c8_i32 : i32
    %4 = vector.broadcast %3 : i32 to vector<24x1xi32>
    %5 = arith.remsi %1, %4 : vector<24x1xi32>
    %c0_i32_2 = arith.constant 0 : i32
    %6 = vector.broadcast %c0_i32_2 : i32 to vector<24x1xi32>
    %7 = arith.cmpi ne, %5, %6 : vector<24x1xi32>
    %c0_i32_3 = arith.constant 0 : i32
    %8 = vector.broadcast %c0_i32_3 : i32 to vector<24x1xi32>
    %9 = arith.cmpi slt, %5, %8 : vector<24x1xi32>
    %c0_i32_4 = arith.constant 0 : i32
    %10 = arith.cmpi slt, %3, %c0_i32_4 : i32
    %11 = vector.broadcast %10 : i1 to vector<24x1xi1>
    %12 = vector.broadcast %11 : vector<24x1xi1> to vector<24x1xi1>
    %13 = arith.xori %9, %12 : vector<24x1xi1>
    %14 = arith.andi %13, %7 : vector<24x1xi1>
    %15 = vector.broadcast %3 : i32 to vector<24x1xi32>
    %16 = arith.addi %5, %15 : vector<24x1xi32>
    %17 = arith.select %14, %16, %5 : vector<24x1xi1>, vector<24x1xi32>
    %18 = vector.shape_cast %17 : vector<24x1xi32> to vector<1x24x1xi32>
    %c2_i32 = arith.constant 2 : i32
    %19 = vector.broadcast %c2_i32 : i32 to vector<1x24x1xi32>
    %20 = arith.cmpi eq, %18, %19 : vector<1x24x1xi32>
    %c3_i32 = arith.constant 3 : i32
    %21 = vector.broadcast %c3_i32 : i32 to vector<1x24x1xi32>
    %22 = arith.cmpi eq, %18, %21 : vector<1x24x1xi32>
    %23 = arith.ori %20, %22 : vector<1x24x1xi1>
    %cst = arith.constant 1.000000e+00 : f32
    %cst_5 = arith.constant -1.000000e+00 : f32
    %24 = vector.broadcast %cst : f32 to vector<1x24x1xf32>
    %25 = vector.broadcast %cst_5 : f32 to vector<1x24x1xf32>
    %26 = arith.select %23, %24, %25 : vector<1x24x1xi1>, vector<1x24x1xf32>
    %27 = vector.broadcast %26 : vector<1x24x1xf32> to vector<2x24x256xf32>
    %28 = arith.mulf %0, %27 : vector<2x24x256xf32>
    %29 = math.exp %28 : vector<2x24x256xf32>
    %cst_6 = arith.constant 1.000000e+00 : f32
    %30 = vector.broadcast %cst_6 : f32 to vector<2x24x256xf32>
    %31 = arith.addf %30, %29 : vector<2x24x256xf32>
    %32 = tpu.reciprocal %31 {approx = true} : vector<2x24x256xf32> -> vector<2x24x256xf32>
    %33 = vector.shape_cast %23 : vector<1x24x1xi1> to vector<1x24x1xi1>
    %34 = vector.broadcast %33 : vector<1x24x1xi1> to vector<2x24x256xi1>
    %35 = arith.select %34, %29, %32 : vector<2x24x256xi1>, vector<2x24x256xf32>
    %c0_7 = arith.constant 0 : index
    %c0_8 = arith.constant 0 : index
    %36 = vector.load %arg3[%c0_7, %c0_8] : memref<2x256xf32, #tpu.memory_space<vmem>>, vector<2x256xf32>
    %37 = vector.extract_strided_slice %36 {offsets = [0, 0], sizes = [1, 256], strides = [1, 1]} : vector<2x256xf32> to vector<1x256xf32>
    %38 = vector.shape_cast %37 : vector<1x256xf32> to vector<1x1x256xf32>
    %39 = vector.extract_strided_slice %36 {offsets = [1, 0], sizes = [1, 256], strides = [1, 1]} : vector<2x256xf32> to vector<1x256xf32>
    %40 = vector.shape_cast %39 : vector<1x256xf32> to vector<1x1x256xf32>
    %c0_i32_9 = arith.constant 0 : i32
    %41 = vector.broadcast %c0_i32_9 : i32 to vector<1x24x1xi32>
    %42 = arith.cmpi eq, %18, %41 : vector<1x24x1xi32>
    %c1_i32_10 = arith.constant 1 : i32
    %43 = vector.broadcast %c1_i32_10 : i32 to vector<1x24x1xi32>
    %44 = arith.cmpi eq, %18, %43 : vector<1x24x1xi32>
    %cst_11 = arith.constant 0.000000e+00 : f32
    %45 = vector.shape_cast %44 : vector<1x24x1xi1> to vector<1x24x1xi1>
    %46 = vector.broadcast %45 : vector<1x24x1xi1> to vector<1x24x256xi1>
    %47 = vector.shape_cast %40 : vector<1x1x256xf32> to vector<1x1x256xf32>
    %48 = vector.broadcast %47 : vector<1x1x256xf32> to vector<1x24x256xf32>
    %49 = vector.broadcast %cst_11 : f32 to vector<1x24x256xf32>
    %50 = arith.select %46, %48, %49 : vector<1x24x256xi1>, vector<1x24x256xf32>
    %51 = vector.shape_cast %42 : vector<1x24x1xi1> to vector<1x24x1xi1>
    %52 = vector.broadcast %51 : vector<1x24x1xi1> to vector<1x24x256xi1>
    %53 = vector.shape_cast %38 : vector<1x1x256xf32> to vector<1x1x256xf32>
    %54 = vector.broadcast %53 : vector<1x1x256xf32> to vector<1x24x256xf32>
    %55 = arith.select %52, %54, %50 : vector<1x24x256xi1>, vector<1x24x256xf32>
    %c0_12 = arith.constant 0 : index
    %c0_13 = arith.constant 0 : index
    %56 = vector.load %arg4[%c0_12, %c0_13] : memref<24x1xf32, #tpu.memory_space<vmem>>, vector<24x1xf32>
    %57 = vector.shape_cast %56 : vector<24x1xf32> to vector<1x24x1xf32>
    %58 = vector.broadcast %57 : vector<1x24x1xf32> to vector<2x24x256xf32>
    %59 = arith.mulf %35, %58 : vector<2x24x256xf32>
    %60 = vector.broadcast %55 : vector<1x24x256xf32> to vector<2x24x256xf32>
    %61 = arith.addf %59, %60 : vector<2x24x256xf32>
    %c0_14 = arith.constant 0 : index
    %c0_15 = arith.constant 0 : index
    %c0_16 = arith.constant 0 : index
    %62 = vector.load %arg5[%c0_14, %c0_15, %c0_16] : memref<2x24x256xf32, #tpu.memory_space<vmem>>, vector<2x24x256xf32>
    tpu.vector_store %arg5[%c0_14, %c0_15, %c0_16], %61 {strides = array<i32>} : memref<2x24x256xf32, #tpu.memory_space<vmem>>, vector<2x24x256xf32>,
    return
  }
  func.func @transform_0(%arg0: i32, %arg1: i32) -> (i32, i32, i32) {
    %c0_i32 = arith.constant 0 : i32
    %c0_i32_0 = arith.constant 0 : i32
    return %arg0, %c0_i32, %arg1 : i32, i32, i32
  }
  func.func @transform_1(%arg0: i32, %arg1: i32) -> (i32, i32) {
    %c0_i32 = arith.constant 0 : i32
    %c0_i32_0 = arith.constant 0 : i32
    return %c0_i32, %arg1 : i32, i32
  }
  func.func @transform_2(%arg0: i32, %arg1: i32) -> (i32, i32) {
    %c0_i32 = arith.constant 0 : i32
    %c0_i32_0 = arith.constant 0 : i32
    %c0_i32_1 = arith.constant 0 : i32
    return %c0_i32, %c0_i32_0 : i32, i32
  }
  func.func @transform_3(%arg0: i32, %arg1: i32) -> (i32, i32, i32) {
    %c0_i32 = arith.constant 0 : i32
    %c0_i32_0 = arith.constant 0 : i32
    return %arg0, %c0_i32, %arg1 : i32, i32, i32
  }
}

</mosaic_0001>

<llo_original>
// kernel: tpu_custom_call.1
$region0: #{tpu_custom_call.1}
  #allocation0 [shape = 'u32[]', space=smem, size = 0x4, offset = 0x4, fixed_abs, tag = 'smem constant byte address 0x4 - core index']
  #allocation1 [shape = 'u32[72,128]{1,0:T(1,128)}', space=vmem, size = 0x9000, scoped, tag = 'internal scratch']
  %s0 = inlined_call_operand.hbm [shape: f32[2,24,256], index: 0, kind: input, shape index: {}]
  %s1 = inlined_call_operand.vmem [shape: f32[2,256], index: 1, kind: input, shape index: {}]
  %s2 = inlined_call_operand.vmem [shape: f32[24,1], index: 2, kind: input, shape index: {}]
  %s3 = inlined_call_operand.hbm [shape: f32[2,24,256], index: 3, kind: output, shape index: {}]
  %s4 = sld [smem:[#allocation0]]
  $region26: #{tpu_custom_call.1} parent=0
    _
  %s6 = ssub.s32 1, %s4
  %s7 = scalar_select 0, %s6, %s4
  $region1: #{tpu_custom_call.1} parent=0
    #allocation2 [shape = 'u8[49152]{0}', space=vmem, size = 0xc000, scoped, tag = 'input window, operand 0, single buffered']
    #allocation3 [shape = 's32[1]{0}', space=sflag, size = 0x4, scoped, tag = 'scoped memory for tpu_custom_call.1']
    #allocation4 [shape = 's32[1]{0}', space=sflag, size = 0x4, scoped, tag = 'scoped memory for tpu_custom_call.1']
    #allocation5 [shape = 'u8[49152]{0}', space=vmem, size = 0xc000, scoped, tag = 'output window, operand 0, single buffered']
    %8 = vsyncpa [#allocation3], 0
    %9 = vsyncpa [#allocation4], 0
    // Predicated region
    $region2: #{tpu_custom_call.1} parent=1 // pred_check
      _
    $region3: #{tpu_custom_call.1} parent=1 // pred_check_branch
      %11 = sbr.rel (0) target = $region5
    $region4: #{tpu_custom_call.1} parent=1 // pred_region
      %13 = vsyncadd [#allocation3], 0
      %s14 = sshll.u32 %s0, 4
      %s15 = int_to_ptr.hbm [resolvable:$true] %s14
      %s16 = sshll.u32 [#allocation2], 4
      %s17 = int_to_ptr.vmem [resolvable:$true] %s16
      %22 = dma.hbm_to_vmem [thread:$0]  %s15, 1536, %s17, [#allocation3], 256, 256, 16
    $region5: #{tpu_custom_call.1} parent=1 // pred_fallthru
      _
    // Predicated region
    $region6: #{tpu_custom_call.1} parent=1 // pred_check
      _
    $region7: #{tpu_custom_call.1} parent=1 // pred_check_branch
      %24 = sbr.rel (0) target = $region9
    $region8: #{tpu_custom_call.1} parent=1 // pred_region
      _
    $region9: #{tpu_custom_call.1} parent=1 // pred_fallthru
      _
    // Predicated region
    $region10: #{tpu_custom_call.1} parent=1 // pred_check
      _
    $region11: #{tpu_custom_call.1} parent=1 // pred_check_branch
      %26 = sbr.rel (0) target = $region13
    $region12: #{tpu_custom_call.1} parent=1 // pred_region
      _
    $region13: #{tpu_custom_call.1} parent=1 // pred_fallthru
      _
    // Predicated region
    $region14: #{tpu_custom_call.1} parent=1 // pred_check
      _
    $region15: #{tpu_custom_call.1} parent=1 // pred_check_branch
      %28 = sbr.rel (0) target = $region17
    $region16: #{tpu_custom_call.1} parent=1 // pred_region
      %30 = dma.done [#allocation3], 1536
    $region17: #{tpu_custom_call.1} parent=1 // pred_fallthru
      _
    %v31 = vld [vmem:[#allocation2] sm:$0xff]
    %v32 = vld [vmem:[#allocation2 + $0x8] sm:$0xff]
    %v33 = vld [vmem:[#allocation2 + $0x10] sm:$0xff]
    %v34 = vld [vmem:[#allocation2 + $0x18] sm:$0xff]
    %v35 = vld [vmem:[#allocation2 + $0x20] sm:$0xff]
    %v36 = vld [vmem:[#allocation2 + $0x28] sm:$0xff]
    %v37 = vld [vmem:[#allocation2 + $0x30] sm:$0xff]
    %v38 = vld [vmem:[#allocation2 + $0x38] sm:$0xff]
    %v39 = vld [vmem:[#allocation2 + $0x40] sm:$0xff]
    %v40 = vld [vmem:[#allocation2 + $0x48] sm:$0xff]
    %v41 = vld [vmem:[#allocation2 + $0x50] sm:$0xff]
    %v42 = vld [vmem:[#allocation2 + $0x58] sm:$0xff]
    %v43 = vlaneseq
    %v44 = vshrl.u32 %v43, 7
    %v45 = vadd.s32 %v44, 8
    %v46 = vadd.s32 %v44, 16
    %vm47 = vcmp.lt.s32.totalorder %v44, 0
    %v48 = vsub.s32 0, %v44
    %v49 = vsel %vm47, %v48, %v44
    %v50 = vshrl.u32 %v49, 3
    %v51 = vand.u32 %v49, 7
    %v52 = vsub.s32 0, %v51
    %v53 = vsel %vm47, %v52, %v51
    %vm54 = vcmp.lt.s32.totalorder %v45, 0
    %v55 = vsub.s32 0, %v45
    %v56 = vsel %vm54, %v55, %v45
    %v57 = vshrl.u32 %v56, 3
    %v58 = vand.u32 %v56, 7
    %v59 = vsub.s32 0, %v58
    %v60 = vsel %vm54, %v59, %v58
    %vm61 = vcmp.lt.s32.totalorder %v46, 0
    %v62 = vsub.s32 0, %v46
    %v63 = vsel %vm61, %v62, %v46
    %v64 = vshrl.u32 %v63, 3
    %v65 = vand.u32 %v63, 7
    %v66 = vsub.s32 0, %v65
    %v67 = vsel %vm61, %v66, %v65
    %vm68 = vcmp.ne.s32.totalorder %v53, 0
    %vm69 = vcmp.ne.s32.totalorder %v60, 0
    %vm70 = vcmp.ne.s32.totalorder %v67, 0
    %vm71 = vcmp.lt.s32.totalorder %v53, 0
    %vm72 = vcmp.lt.s32.totalorder %v60, 0
    %vm73 = vcmp.lt.s32.totalorder %v67, 0
    %vm74 = vmand %vm71, %vm68
    %vm75 = vmand %vm72, %vm69
    %vm76 = vmand %vm73, %vm70
    %v77 = vadd.s32 %v53, 8
    %v78 = vadd.s32 %v60, 8
    %v79 = vadd.s32 %v67, 8
    %v80 = vsel %vm74, %v77, %v53
    %v81 = vsel %vm75, %v78, %v60
    %v82 = vsel %vm76, %v79, %v67
    %vm83 = vcmp.eq.s32.totalorder %v80, 2
    %vm84 = vcmp.eq.s32.totalorder %v81, 2
    %vm85 = vcmp.eq.s32.totalorder %v82, 2
    %vm86 = vcmp.eq.s32.totalorder %v80, 3
    %vm87 = vcmp.eq.s32.totalorder %v81, 3
    %vm88 = vcmp.eq.s32.totalorder %v82, 3
    %vm89 = vmor %vm83, %vm86
    %vm90 = vmor %vm84, %vm87
    %vm91 = vmor %vm85, %vm88
    %v92 = vsel %vm89, 1.0, -1.0
    %v93 = vsel %vm90, 1.0, -1.0
    %v94 = vsel %vm91, 1.0, -1.0
    %v95 = vmul.f32 %v31, %v92
    %v96 = vmul.f32 %v32, %v92
    %v97 = vmul.f32 %v33, %v93
    %v98 = vmul.f32 %v34, %v93
    %v99 = vmul.f32 %v35, %v94
    %v100 = vmul.f32 %v36, %v94
    %v101 = vmul.f32 %v37, %v92
    %v102 = vmul.f32 %v38, %v92
    %v103 = vmul.f32 %v39, %v93
    %v104 = vmul.f32 %v40, %v93
    %v105 = vmul.f32 %v41, %v94
    %v106 = vmul.f32 %v42, %v94
    %v107 = vmul.f32 %v95, 1.442695
    %v108 = vpow.pop %v107
    %v109 = vmul.f32 %v96, 1.442695
    %v110 = vpow.pop %v109
    %v111 = vmul.f32 %v97, 1.442695
    %v112 = vpow.pop %v111
    %v113 = vmul.f32 %v98, 1.442695
    %v114 = vpow.pop %v113
    %v115 = vmul.f32 %v99, 1.442695
    %v116 = vpow.pop %v115
    %v117 = vmul.f32 %v100, 1.442695
    %v118 = vpow.pop %v117
    %v119 = vmul.f32 %v101, 1.442695
    %v120 = vpow.pop %v119
    %v121 = vmul.f32 %v102, 1.442695
    %v122 = vpow.pop %v121
    %v123 = vmul.f32 %v103, 1.442695
    %v124 = vpow.pop %v123
    %v125 = vmul.f32 %v104, 1.442695
    %v126 = vpow.pop %v125
    %v127 = vmul.f32 %v105, 1.442695
    %v128 = vpow.pop %v127
    %v129 = vmul.f32 %v106, 1.442695
    %v130 = vpow.pop %v129
    %v131 = vadd.f32 %v108, 1.0
    %v132 = vadd.f32 %v110, 1.0
    %v133 = vadd.f32 %v112, 1.0
    %v134 = vadd.f32 %v114, 1.0
    %v135 = vadd.f32 %v116, 1.0
    %v136 = vadd.f32 %v118, 1.0
    %v137 = vadd.f32 %v120, 1.0
    %v138 = vadd.f32 %v122, 1.0
    %v139 = vadd.f32 %v124, 1.0
    %v140 = vadd.f32 %v126, 1.0
    %v141 = vadd.f32 %v128, 1.0
    %v142 = vadd.f32 %v130, 1.0
    %v143 = vrcp.pop %v131
    %v144 = vrcp.pop %v132
    %v145 = vrcp.pop %v133
    %v146 = vrcp.pop %v134
    %v147 = vrcp.pop %v135
    %v148 = vrcp.pop %v136
    %v149 = vrcp.pop %v137
    %v150 = vrcp.pop %v138
    %v151 = vrcp.pop %v139
    %v152 = vrcp.pop %v140
    %v153 = vrcp.pop %v141
    %v154 = vrcp.pop %v142
    %v155 = vsel %vm89, 1, 0
    %v156 = vsel %vm90, 1, 0
    %v157 = vsel %vm91, 1, 0
    %vm158 = vcmp.eq.s32.totalorder %v155, 1
    %vm159 = vcmp.eq.s32.totalorder %v156, 1
    %vm160 = vcmp.eq.s32.totalorder %v157, 1
    %v161 = vsel %vm158, %v108, %v143
    %v162 = vsel %vm158, %v110, %v144
    %v163 = vsel %vm159, %v112, %v145
    %v164 = vsel %vm159, %v114, %v146
    %v165 = vsel %vm160, %v116, %v147
    %v166 = vsel %vm160, %v118, %v148
    %v167 = vsel %vm158, %v120, %v149
    %v168 = vsel %vm158, %v122, %v150
    %v169 = vsel %vm159, %v124, %v151
    %v170 = vsel %vm159, %v126, %v152
    %v171 = vsel %vm160, %v128, %v153
    %v172 = vsel %vm160, %v130, %v154
    %v173 = vld [vmem:[%s1] sm:$0xf]
    %vm174 = vcmp.eq.s32.totalorder %v80, 0
    %vm175 = vcmp.eq.s32.totalorder %v81, 0
    %vm176 = vcmp.eq.s32.totalorder %v82, 0
    %vm177 = vcmp.eq.s32.totalorder %v80, 1
    %vm178 = vcmp.eq.s32.totalorder %v81, 1
    %vm179 = vcmp.eq.s32.totalorder %v82, 1
    %v180 = vsel %vm177, 1, 0
    %v181 = vsel %vm178, 1, 0
    %v182 = vsel %vm179, 1, 0
    %vm183 = vcmp.eq.s32.totalorder %v180, 1
    %vm184 = vcmp.eq.s32.totalorder %v181, 1
    %vm185 = vcmp.eq.s32.totalorder %v182, 1
    %v187 = vperm.slane %v173, 1
    %v188 = vperm.slane %v173, 3
    %v191 = vperm.slane %v187, 1
    %v192 = vperm.slane %v188, 1
    %v193 = vsel %vm183, %v191, 0.0
    %v194 = vsel %vm183, %v192, 0.0
    %v195 = vsel %vm184, %v191, 0.0
    %v196 = vsel %vm184, %v192, 0.0
    %v197 = vsel %vm185, %v191, 0.0
    %v198 = vsel %vm185, %v192, 0.0
    %v199 = vsel %vm174, 1, 0
    %v200 = vsel %vm175, 1, 0
    %v201 = vsel %vm176, 1, 0
    %vm202 = vcmp.eq.s32.totalorder %v199, 1
    %vm203 = vcmp.eq.s32.totalorder %v200, 1
    %vm204 = vcmp.eq.s32.totalorder %v201, 1
    %v205 = vperm.slane %v173, 0
    %v206 = vperm.slane %v173, 2
    %v209 = vperm.slane %v205, 0
    %v210 = vperm.slane %v206, 0
    %v211 = vsel %vm202, %v209, %v193
    %v212 = vsel %vm202, %v210, %v194
    %v213 = vsel %vm203, %v209, %v195
    %v214 = vsel %vm203, %v210, %v196
    %v215 = vsel %vm204, %v209, %v197
    %v216 = vsel %vm204, %v210, %v198
    %v217 = vld [vmem:[%s2] sm:$0xff]
    %v218 = vld [vmem:[%s2 + $0x8] sm:$0xff]
    %v219 = vld [vmem:[%s2 + $0x10] sm:$0xff]
    %221 = vset.pattern.permute.xlu0 0
    %222 = vperm.xlu0 %221, %v217
    %v223 = vpop.permute.xlu0 %222
    %226 = vset.pattern.permute.xlu0 0
    %227 = vperm.xlu0 %226, %v218
    %v228 = vpop.permute.xlu0 %227
    %231 = vset.pattern.permute.xlu0 0
    %232 = vperm.xlu0 %231, %v219
    %v233 = vpop.permute.xlu0 %232
    %v235 = vmul.f32 %v161, %v223
    %v236 = vmul.f32 %v162, %v223
    %v237 = vmul.f32 %v163, %v228
    %v238 = vmul.f32 %v164, %v228
    %v239 = vmul.f32 %v165, %v233
    %v240 = vmul.f32 %v166, %v233
    %v241 = vmul.f32 %v167, %v223
    %v242 = vmul.f32 %v168, %v223
    %v243 = vmul.f32 %v169, %v228
    %v244 = vmul.f32 %v170, %v228
    %v245 = vmul.f32 %v171, %v233
    %v246 = vmul.f32 %v172, %v233
    %v247 = vadd.f32 %v235, %v211
    %v248 = vadd.f32 %v236, %v212
    %v249 = vadd.f32 %v237, %v213
    %v250 = vadd.f32 %v238, %v214
    %v251 = vadd.f32 %v239, %v215
    %v252 = vadd.f32 %v240, %v216
    %v253 = vadd.f32 %v241, %v211
    %v254 = vadd.f32 %v242, %v212
    %v255 = vadd.f32 %v243, %v213
    %v256 = vadd.f32 %v244, %v214
    %v257 = vadd.f32 %v245, %v215
    %v258 = vadd.f32 %v246, %v216
    %259 = vst [vmem:[#allocation5] sm:$0xff] %v247
    %260 = vst [vmem:[#allocation5 + $0x8] sm:$0xff] %v248
    %261 = vst [vmem:[#allocation5 + $0x10] sm:$0xff] %v249
    %262 = vst [vmem:[#allocation5 + $0x18] sm:$0xff] %v250
    %263 = vst [vmem:[#allocation5 + $0x20] sm:$0xff] %v251
    %264 = vst [vmem:[#allocation5 + $0x28] sm:$0xff] %v252
    %265 = vst [vmem:[#allocation5 + $0x30] sm:$0xff] %v253
    %266 = vst [vmem:[#allocation5 + $0x38] sm:$0xff] %v254
    %267 = vst [vmem:[#allocation5 + $0x40] sm:$0xff] %v255
    %268 = vst [vmem:[#allocation5 + $0x48] sm:$0xff] %v256
    %269 = vst [vmem:[#allocation5 + $0x50] sm:$0xff] %v257
    %270 = vst [vmem:[#allocation5 + $0x58] sm:$0xff] %v258
    // Predicated region
    $region18: #{tpu_custom_call.1} parent=1 // pred_check
      _
    $region19: #{tpu_custom_call.1} parent=1 // pred_check_branch
      %272 = sbr.rel (0) target = $region21
    $region20: #{tpu_custom_call.1} parent=1 // pred_region
      %274 = vsyncadd [#allocation4], 0
      %s275 = sshll.u32 [#allocation5], 4
      %s276 = int_to_ptr.vmem [resolvable:$true] %s275
      %s277 = sshll.u32 %s3, 4
      %s278 = int_to_ptr.hbm [resolvable:$true] %s277
      %283 = dma.vmem_to_hbm [thread:$0]  %s276, 1536, %s278, [#allocation4], 256, 256, 16
    $region21: #{tpu_custom_call.1} parent=1 // pred_fallthru
      _
    // Predicated region
    $region22: #{tpu_custom_call.1} parent=1 // pred_check
      _
    $region23: #{tpu_custom_call.1} parent=1 // pred_check_branch
      %285 = sbr.rel (0) target = $region25
    $region24: #{tpu_custom_call.1} parent=1 // pred_region
      %287 = dma.done [#allocation4], 1536
    $region25: #{tpu_custom_call.1} parent=1 // pred_fallthru
      _
    %288 = vsyncpa [#allocation3], 1
    %289 = vsyncpa [#allocation4], 1

</llo_original>
